<compile_context>
chip_gen: v5e
topology: v5e:2x2
jax: 0.10.0
libtpu: 0.0.40
codegen_flags: <defaults>
</compile_context>

<pallas_src>
from functools import partial

import numpy as np
import jax
import jax.numpy as jnp
from jax import lax
from jax.experimental import pallas as pl
from jax.experimental.pallas import tpu as pltpu


def make_weight(key, noc, nic, ks, dtype=jnp.float32):
    """Deterministic re-creation of Conv2d.__init__ weight:
    randn(noc, nic, ks, ks) normalized by its per-(oc, ic) Frobenius norm."""
    w = jax.random.normal(key, (noc, nic, ks, ks), dtype=dtype)
    norm = jnp.sqrt(jnp.sum(w * w, axis=(2, 3), keepdims=True))
    return w / norm


def _round_up(x, m):
    return ((x + m - 1) // m) * m


def _cdiv(a, b):
    return (a + b - 1) // b


def _conv_im2col_kernel(w_ref, xa_ref, xb_ref, o_ref, col_ref, *, tap_offsets):
    # w_ref  : (Cout, Kp)       whole filter, VMEM-resident (constant block idx)
    # xa_ref : (1, Cp, TP)      main flat-spatial tile
    # xb_ref : (1, Cp, HALO)    halo: the next HALO columns after xa
    # o_ref  : (1, Cout, TP)    lane-dense output tile (TP multiple of 128)
    # col_ref: (Kp, TP)         VMEM scratch: in-kernel im2col column tile
    tp = o_ref.shape[-1]
    cp = xa_ref.shape[1]
    xcat = jnp.concatenate([xa_ref[0], xb_ref[0]], axis=-1)    # (Cp, TP+HALO)
    # Build the (Kp, TP) column tile in VMEM: one static lane-shifted slice
    # per tap (unrolled at trace time; offsets are Python ints).
    for t, d in enumerate(tap_offsets):
        col_ref[t * cp:(t + 1) * cp, :] = lax.slice(xcat, (0, d), (cp, d + tp))
    # Single big-K MXU matmul, f32 accumulation.
    o_ref[0] = jnp.dot(
        w_ref[...], col_ref[...], preferred_element_type=jnp.float32
    ).astype(o_ref.dtype)


@partial(jax.jit, static_argnames=("stride", "compute_dtype"))
def conv2d_pallas(x, weight, stride=1, compute_dtype=jnp.float32):
    """Forward pass of the PyTorch Conv2d module.

    x      : (N, Cin, H, W)  float32  (NCHW, like torch)
    weight : (Cout, Cin, ks, ks)      (OIHW, like torch)
    returns: (N, Cout, Ho, Wo)        (NCHW)
    """
    N, Cin, H, W = x.shape
    Cout, Cin2, ks, ks2 = weight.shape
    assert Cin == Cin2 and ks == ks2
    s = int(stride)
    out_dtype = x.dtype

    p1 = int(np.floor((ks - 1) / 2))
    p2 = int(np.ceil((ks - 1) / 2))
    Ho = (H + p1 + p2 - ks) // s + 1
    Wo = (W + p1 + p2 - ks) // s + 1

    # Stride folded away via space-to-depth -> stride-1 conv with
    #   C' = Cin*s*s channels, kernel ks' = ceil(ks/s).
    ksq = _cdiv(ks, s)
    Cq = Cin * s * s
    Hq = Ho + ksq - 1
    Wq = Wo + ksq - 1
    T = ksq * ksq

    in_bytes = jnp.dtype(compute_dtype).itemsize
    out_bytes = jnp.dtype(out_dtype).itemsize
    sub = {4: 8, 2: 16, 1: 32}[in_bytes]          # dtype-packed sublane multiple
    Cp = _round_up(Cq, sub)
    Kp = T * Cp

    # ---- wrapper-side layout (~1x input traffic total, fused by XLA) --------
    x = x.astype(compute_dtype)                   # cast BEFORE any layout pass
    weight = weight.astype(compute_dtype)

    Ht, Wt = Hq * s, Wq * s
    xp = jnp.pad(x, ((0, 0), (0, 0),
                     (p1, max(0, Ht - H - p1)), (p1, max(0, Wt - W - p1))))
    xp = xp[:, :, :Ht, :Wt]
    # space-to-depth: xq[n, (ry*s+rx)*Cin + c, i, j] = xp[n, c, i*s+ry, j*s+rx]
    xq = xp.reshape(N, Cin, Hq, s, Wq, s).transpose(0, 3, 5, 1, 2, 4)
    xq = xq.reshape(N, Cq, Hq, Wq)
    xq = jnp.pad(xq, ((0, 0), (0, Cp - Cq), (0, 0), (0, 0)))

    # weight -> stride-1 form with matching channel ordering, then (Cout, Kp)
    wq = jnp.pad(weight, ((0, 0), (0, 0), (0, ksq * s - ks), (0, ksq * s - ks)))
    wq = wq.reshape(Cout, Cin, ksq, s, ksq, s).transpose(0, 3, 5, 1, 2, 4)
    wq = wq.reshape(Cout, Cq, ksq, ksq)
    wq = jnp.pad(wq, ((0, 0), (0, Cp - Cq), (0, 0), (0, 0)))
    w2 = jnp.transpose(wq, (0, 2, 3, 1)).reshape(Cout, Kp)   # k=(qy*ks'+qx)*Cp+c'

    # ---- tiling of the flattened spatial axis --------------------------------
    Q_out = Ho * Wq                               # output flat positions
    halo = (ksq - 1) * (Wq + 1)                   # max in-kernel tap offset
    HALO = _round_up(max(halo, 1), 128)

    # TP from a VMEM budget (double-buffered tiles + in-kernel temporaries).
    budget = 20 * 1024 * 1024
    col_cost = in_bytes * Cp * (3 + 2 * T) + out_bytes * 2 * Cout + 4 * Cout
    fixed = in_bytes * (3 * Cp * HALO + 2 * Cout * Kp)
    tp_budget = max(128, ((budget - fixed) // col_cost) // 128 * 128)
    # Balanced tiles: the flat axis is never padded by more than ~HALO.
    nt = max(1, _cdiv(_round_up(Q_out, 128), tp_budget))
    TP = _round_up(_cdiv(Q_out, nt), HALO)        # multiple of HALO (and 128)
    Q_out_pad = nt * TP
    Q_in_pad = (nt + 1) * TP                      # room for the last halo block
    rB = TP // HALO

    xf = xq.reshape(N, Cp, Hq * Wq)
    xf = jnp.pad(xf, ((0, 0), (0, 0), (0, Q_in_pad - Hq * Wq)))

    tap_offsets = tuple(qy * Wq + qx for qy in range(ksq) for qx in range(ksq))
    kernel = partial(_conv_im2col_kernel, tap_offsets=tap_offsets)

    cost = pl.CostEstimate(
        flops=2 * N * nt * Cout * Kp * TP,
        transcendentals=0,
        bytes_accessed=(Cout * Kp * in_bytes
                        + N * Cp * nt * (TP + HALO) * in_bytes
                        + N * Cout * Q_out_pad * out_bytes),
    )

    out_flat = pl.pallas_call(
        kernel,
        out_shape=jax.ShapeDtypeStruct((N, Cout, Q_out_pad), out_dtype),
        grid=(N, nt),
        in_specs=[
            # TODO(synk): confirm via pl.lower_as_mlir that this constant-index
            # weight block stays single-buffered and is not re-DMA'd per step.
            pl.BlockSpec((Cout, Kp), lambda n, p: (0, 0)),              # resident
            pl.BlockSpec((1, Cp, TP), lambda n, p: (n, 0, p)),          # main
            pl.BlockSpec((1, Cp, HALO), lambda n, p: (n, 0, (p + 1) * rB)),  # halo
        ],
        out_specs=pl.BlockSpec((1, Cout, TP), lambda n, p: (n, 0, p)),
        scratch_shapes=[pltpu.VMEM((Kp, TP), compute_dtype)],
        compiler_params=pltpu.CompilerParams(
            dimension_semantics=("parallel", "parallel"),
            vmem_limit_bytes=32 * 1024 * 1024,
        ),
        cost_estimate=cost,
    )(w2, xf, xf)

    # Drop the (ks'-1) wrap-around columns per row and the tile padding.
    # TODO(synk): this is one extra output-sized pass; a masked in-kernel store
    # of only the valid columns would remove it.
    out = out_flat[:, :, :Q_out].reshape(N, Cout, Ho, Wq)[:, :, :, :Wo]
    return out


if __name__ == "__main__":
    key = jax.random.PRNGKey(0)
    kx, kw = jax.random.split(key)

    # small shapes consistent with the module
    N, nic, H, W = 2, 4, 16, 16
    noc, ks = 8, 3

    x = jax.random.normal(kx, (N, nic, H, W), dtype=jnp.float32)
    weight = make_weight(kw, noc, nic, ks)

    p1 = int(np.floor((ks - 1) / 2))
    p2 = int(np.ceil((ks - 1) / 2))

    def reference(stride):
        return lax.conv_general_dilated(
            x, weight,
            window_strides=(stride, stride),
            padding=((p1, p2), (p1, p2)),
            dimension_numbers=("NCHW", "OIHW", "NCHW"),
        )

    # f32 path, both the decimating (stride=2) and plain (stride=1) convs
    for stride in (2, 1):
        ref = reference(stride)
        out = jax.block_until_ready(conv2d_pallas(x, weight, stride=stride))
        np.testing.assert_allclose(np.asarray(out), np.asarray(ref),
                                   rtol=1e-4, atol=1e-4)

    # bf16-operand path (f32 accumulation) -- looser tolerance
    ref2 = reference(2)
    out_bf16 = jax.block_until_ready(
        conv2d_pallas(x, weight, stride=2, compute_dtype=jnp.bfloat16))
    np.testing.assert_allclose(np.asarray(out_bf16), np.asarray(ref2),
                               rtol=5e-2, atol=5e-2)

    print("KERNEL_OK")
</pallas_src>

<mosaic_0001>
module attributes {stable_mosaic.version = 11 : i64} {
  func.func @_conv_im2col_kernel(%arg0: i32, %arg1: i32, %arg2: memref<8x64xf32, #tpu.memory_space<vmem>>, %arg3: memref<1x16x128xf32, #tpu.memory_space<vmem>>, %arg4: memref<1x16x128xf32, #tpu.memory_space<vmem>>, %arg5: memref<1x8x128xf32, #tpu.memory_space<vmem>>, %arg6: memref<64x128xf32, #tpu.memory_space<vmem>>) attributes {dimension_semantics = [#tpu.dimension_semantics<parallel>, #tpu.dimension_semantics<parallel>], iteration_bounds = array<i64: 2, 1>, scalar_prefetch = 0 : i64, scratch_operands = 1 : i64, tpu.core_type = #tpu.core_type<tc>, window_params = [{pipeline_mode = #tpu.pipeline_mode<synchronous>, transform_indices = @transform_0, window_bounds = array<i64: 8, 64>}, {transform_indices = @transform_1, window_bounds = array<i64: 1, 16, 128>}, {transform_indices = @transform_2, window_bounds = array<i64: 1, 16, 128>}, {transform_indices = @transform_3, window_bounds = array<i64: 1, 8, 128>}]} {
    %c0 = arith.constant 0 : index
    %c0_0 = arith.constant 0 : index
    %c0_1 = arith.constant 0 : index
    %0 = vector.load %arg3[%c0, %c0_0, %c0_1] : memref<1x16x128xf32, #tpu.memory_space<vmem>>, vector<1x16x128xf32>
    %1 = vector.shape_cast %0 : vector<1x16x128xf32> to vector<16x128xf32>
    %c0_2 = arith.constant 0 : index
    %c0_3 = arith.constant 0 : index
    %c0_4 = arith.constant 0 : index
    %2 = vector.load %arg4[%c0_2, %c0_3, %c0_4] : memref<1x16x128xf32, #tpu.memory_space<vmem>>, vector<1x16x128xf32>
    %3 = vector.shape_cast %2 : vector<1x16x128xf32> to vector<16x128xf32>
    %4 = tpu.concatenate %1, %3 in 1 : vector<16x128xf32>, vector<16x128xf32> -> vector<16x256xf32>
    %5 = vector.extract_strided_slice %4 {offsets = [0, 0], sizes = [16, 128], strides = [1, 1]} : vector<16x256xf32> to vector<16x128xf32>
    %c0_5 = arith.constant 0 : index
    %c0_6 = arith.constant 0 : index
    %6 = vector.load %arg6[%c0_5, %c0_6] : memref<64x128xf32, #tpu.memory_space<vmem>>, vector<16x128xf32>
    tpu.vector_store %arg6[%c0_5, %c0_6], %5 {strides = array<i32>} : memref<64x128xf32, #tpu.memory_space<vmem>>, vector<16x128xf32>,
    %7 = vector.extract_strided_slice %4 {offsets = [0, 1], sizes = [16, 128], strides = [1, 1]} : vector<16x256xf32> to vector<16x128xf32>
    %c16 = arith.constant 16 : index
    %c0_7 = arith.constant 0 : index
    %8 = vector.load %arg6[%c16, %c0_7] : memref<64x128xf32, #tpu.memory_space<vmem>>, vector<16x128xf32>
    tpu.vector_store %arg6[%c16, %c0_7], %7 {strides = array<i32>} : memref<64x128xf32, #tpu.memory_space<vmem>>, vector<16x128xf32>,
    %9 = vector.extract_strided_slice %4 {offsets = [0, 9], sizes = [16, 128], strides = [1, 1]} : vector<16x256xf32> to vector<16x128xf32>
    %c32 = arith.constant 32 : index
    %c0_8 = arith.constant 0 : index
    %10 = vector.load %arg6[%c32, %c0_8] : memref<64x128xf32, #tpu.memory_space<vmem>>, vector<16x128xf32>
    tpu.vector_store %arg6[%c32, %c0_8], %9 {strides = array<i32>} : memref<64x128xf32, #tpu.memory_space<vmem>>, vector<16x128xf32>,
    %11 = vector.extract_strided_slice %4 {offsets = [0, 10], sizes = [16, 128], strides = [1, 1]} : vector<16x256xf32> to vector<16x128xf32>
    %c48 = arith.constant 48 : index
    %c0_9 = arith.constant 0 : index
    %12 = vector.load %arg6[%c48, %c0_9] : memref<64x128xf32, #tpu.memory_space<vmem>>, vector<16x128xf32>
    tpu.vector_store %arg6[%c48, %c0_9], %11 {strides = array<i32>} : memref<64x128xf32, #tpu.memory_space<vmem>>, vector<16x128xf32>,
    %c0_10 = arith.constant 0 : index
    %c0_11 = arith.constant 0 : index
    %13 = vector.load %arg2[%c0_10, %c0_11] : memref<8x64xf32, #tpu.memory_space<vmem>>, vector<8x64xf32>
    %c0_12 = arith.constant 0 : index
    %c0_13 = arith.constant 0 : index
    %14 = vector.load %arg6[%c0_12, %c0_13] : memref<64x128xf32, #tpu.memory_space<vmem>>, vector<64x128xf32>
    %cst = arith.constant dense<0.000000e+00> : vector<8x128xf32>
    %15 = tpu.matmul %13, %14, %cst {dimension_numbers = #tpu.dot_dimension_numbers<[1], [0], [0], [1], [0, 0, 1, 1], [], []>} : vector<8x64xf32>, vector<64x128xf32>, vector<8x128xf32> -> vector<8x128xf32>
    %c0_14 = arith.constant 0 : index
    %c0_15 = arith.constant 0 : index
    %c0_16 = arith.constant 0 : index
    %16 = vector.load %arg5[%c0_14, %c0_15, %c0_16] : memref<1x8x128xf32, #tpu.memory_space<vmem>>, vector<1x8x128xf32>
    %17 = vector.shape_cast %16 : vector<1x8x128xf32> to vector<8x128xf32>
    %18 = vector.shape_cast %15 : vector<8x128xf32> to vector<1x8x128xf32>
    tpu.vector_store %arg5[%c0_14, %c0_15, %c0_16], %18 {strides = array<i32>} : memref<1x8x128xf32, #tpu.memory_space<vmem>>, vector<1x8x128xf32>,
    return
  }
  func.func @transform_0(%arg0: i32, %arg1: i32) -> (i32, i32) {
    %c0_i32 = arith.constant 0 : i32
    %c0_i32_0 = arith.constant 0 : i32
    %c0_i32_1 = arith.constant 0 : i32
    return %c0_i32, %c0_i32_0 : i32, i32
  }
  func.func @transform_1(%arg0: i32, %arg1: i32) -> (i32, i32, i32) {
    %c0_i32 = arith.constant 0 : i32
    %c0_i32_0 = arith.constant 0 : i32
    return %arg0, %c0_i32, %arg1 : i32, i32, i32
  }
  func.func @transform_2(%arg0: i32, %arg1: i32) -> (i32, i32, i32) {
    %c1_i32 = arith.constant 1 : i32
    %0 = arith.addi %arg1, %c1_i32 : i32
    %c1_i32_0 = arith.constant 1 : i32
    %1 = arith.muli %0, %c1_i32_0 : i32
    %c0_i32 = arith.constant 0 : i32
    %c0_i32_1 = arith.constant 0 : i32
    return %arg0, %c0_i32, %1 : i32, i32, i32
  }
  func.func @transform_3(%arg0: i32, %arg1: i32) -> (i32, i32, i32) {
    %c0_i32 = arith.constant 0 : i32
    %c0_i32_0 = arith.constant 0 : i32
    return %arg0, %c0_i32, %arg1 : i32, i32, i32
  }
}

</mosaic_0001>

<llo_original>
// kernel: conv2d_pallas.1
$region0: #{conv2d_pallas.1}
  #allocation0 [shape = 'u32[]', space=smem, size = 0x4, offset = 0x4, fixed_abs, tag = 'smem constant byte address 0x4 - core index']
  #allocation1 [shape = 'u32[72,128]{1,0:T(1,128)}', space=vmem, size = 0x9000, scoped, tag = 'internal scratch']
  #allocation2 [shape = 'f32[64,128]{1,0:T(8,128)}', space=vmem, size = 0x8000, scoped, tag = 'scratch operand']
  %s0 = inlined_call_operand.vmem [shape: f32[8,64], index: 0, kind: input, shape index: {}]
  %s1 = inlined_call_operand.vmem [shape: f32[2,16,256], index: 1, kind: input, shape index: {}, may-alias: {1,2}]
  %s2 = inlined_call_operand.vmem [shape: f32[2,16,256], index: 2, kind: input, shape index: {}, may-alias: {1,2}]
  %s3 = inlined_call_operand.vmem [shape: f32[2,8,128], index: 3, kind: output, shape index: {}]
  %s4 = sld [smem:[#allocation0]]
  $region121: #{conv2d_pallas.1} parent=0
    _
  %s6 = ssub.s32 1, %s4
  %s7 = scalar_select 0, %s6, %s4
  $region1: #{conv2d_pallas.1} parent=0
    #allocation3 [shape = 'u8[16384]{0}', space=vmem, size = 0x4000, scoped, tag = 'input window, operand 1']
    #allocation4 [shape = 'u8[16384]{0}', space=vmem, size = 0x4000, scoped, tag = 'input window, operand 2']
    loop: start=0, step=1, limit=4
    $region2: #{conv2d_pallas.1} parent=1 // loop_pre_header
      _
    $region3: #{conv2d_pallas.1} parent=1 // loop_header
      %s9 = sphi 0, %s13
      %p10 = scmp.ge.s32.totalorder %s9, 4
      %s16 = sphi 0, %s28
      %s17 = sphi 0, %s24
      %s18 = sphi 0, %s16
      %s19 = sphi 0, %s17
      %s20 = sphi 0, %s18
      %s21 = sphi 0, %s19
      %s29 = sphi 0, %s29
      %s31 = sphi 0, %s29
      %s32 = sphi 0, %s31
      %s46 = sphi 0, %s32
      %s54 = sphi 0, %s56
      %s57 = sphi 0, %s54
      %s58 = sphi 0, %s57
      %s74 = sphi 0, %s58
      %s84 = sphi 0, %s86
      %s87 = sphi 0, %s84
      %s88 = sphi 0, %s87
      %s104 = sphi 0, %s88
      %s112 = sphi 0, %s114
      %s115 = sphi 0, %s112
      %s116 = sphi 0, %s115
      %s132 = sphi 0, %s116
    $region4: #{conv2d_pallas.1} parent=1 // loop_header_branch
      %12 = sbr.rel (%p10) target = $region8
    $region5: #{conv2d_pallas.1} parent=1 // loop_body
      %s14 = ssub.s32 %s9, 1
      %s15 = ssub.s32 %s9, 2
      %s22 = sadd.s32 1, %s17
      %p23 = scmp.ge.s32.totalorder %s22, 1
      %s24 = scalar_select %p23, 0, %s22
      %s25 = sadd.s32 1, %s16
      %s26 = scalar_select %p23, %s25, %s16
      %p27 = scmp.ge.s32.totalorder %s26, 2
      %s28 = scalar_select %p27, 0, %s26
      %s30 = sadd.s32 %s29, 1
      %p33 = scmp.eq.s32.totalorder %s9, 1
      %p34 = scmp.ne.s32.totalorder %s29, %s31
      %p35 = scmp.eq.s32.totalorder %s9, 0
      %p36 = por %p34, %p35
      %p37 = scmp.ne.s32.totalorder %s29, %s31
      %p38 = scmp.eq.s32.totalorder %s14, 1
      %p39 = por %p37, %p38
      %p40 = scmp.ne.s32.totalorder %s31, %s32
      %p41 = scmp.eq.s32.totalorder %s14, 0
      %p42 = por %p40, %p41
      %p43 = scmp.ne.s32.totalorder %s31, %s32
      %p44 = scmp.eq.s32.totalorder %s15, 1
      %p45 = por %p43, %p44
      %p47 = scmp.ne.s32.totalorder %s32, %s46
      %p48 = scmp.eq.s32.totalorder %s15, 0
      %p49 = por %p47, %p48
      %s50 = ssub.s32 %s16, %s28
      %s51 = ssub.s32 %s17, %s24
      %s52 = sor.u32 %s50, %s51
      %p53 = scmp.eq.s32.totalorder %s52, 0
      %s55 = sadd.s32 %s54, 1
      %s56 = scalar_select %p53, %s54, %s55
      %p59 = pneg %p53
      %p60 = scmp.eq.s32.totalorder %s9, 1
      %p61 = por %p59, %p60
      %p62 = scmp.ne.s32.totalorder %s54, %s57
      %p63 = scmp.eq.s32.totalorder %s9, 0
      %p64 = por %p62, %p63
      %p65 = scmp.ne.s32.totalorder %s54, %s57
      %p66 = scmp.eq.s32.totalorder %s14, 1
      %p67 = por %p65, %p66
      %p68 = scmp.ne.s32.totalorder %s57, %s58
      %p69 = scmp.eq.s32.totalorder %s14, 0
      %p70 = por %p68, %p69
      %p71 = scmp.ne.s32.totalorder %s57, %s58
      %p72 = scmp.eq.s32.totalorder %s15, 1
      %p73 = por %p71, %p72
      %p75 = scmp.ne.s32.totalorder %s58, %s74
      %p76 = scmp.eq.s32.totalorder %s15, 0
      %p77 = por %p75, %p76
      %s78 = sadd.s32 %s17, 1
      %s79 = sadd.s32 %s24, 1
      %s80 = ssub.s32 %s16, %s28
      %s81 = ssub.s32 %s78, %s79
      %s82 = sor.u32 %s80, %s81
      %p83 = scmp.eq.s32.totalorder %s82, 0
      %s85 = sadd.s32 %s84, 1
      %s86 = scalar_select %p83, %s84, %s85
      %p89 = pneg %p83
      %p90 = scmp.eq.s32.totalorder %s9, 1
      %p91 = por %p89, %p90
      %p92 = scmp.ne.s32.totalorder %s84, %s87
      %p93 = scmp.eq.s32.totalorder %s9, 0
      %p94 = por %p92, %p93
      %p95 = scmp.ne.s32.totalorder %s84, %s87
      %p96 = scmp.eq.s32.totalorder %s14, 1
      %p97 = por %p95, %p96
      %p98 = scmp.ne.s32.totalorder %s87, %s88
      %p99 = scmp.eq.s32.totalorder %s14, 0
      %p100 = por %p98, %p99
      %p101 = scmp.ne.s32.totalorder %s87, %s88
      %p102 = scmp.eq.s32.totalorder %s15, 1
      %p103 = por %p101, %p102
      %p105 = scmp.ne.s32.totalorder %s88, %s104
      %p106 = scmp.eq.s32.totalorder %s15, 0
      %p107 = por %p105, %p106
      %s108 = ssub.s32 %s16, %s28
      %s109 = ssub.s32 %s17, %s24
      %s110 = sor.u32 %s108, %s109
      %p111 = scmp.eq.s32.totalorder %s110, 0
      %s113 = sadd.s32 %s112, 1
      %s114 = scalar_select %p111, %s112, %s113
      %p117 = pneg %p111
      %p118 = scmp.eq.s32.totalorder %s9, 1
      %p119 = por %p117, %p118
      %p120 = scmp.ne.s32.totalorder %s112, %s115
      %p121 = scmp.eq.s32.totalorder %s9, 0
      %p122 = por %p120, %p121
      %p123 = scmp.ne.s32.totalorder %s112, %s115
      %p124 = scmp.eq.s32.totalorder %s14, 1
      %p125 = por %p123, %p124
      %p126 = scmp.ne.s32.totalorder %s115, %s116
      %p127 = scmp.eq.s32.totalorder %s14, 0
      %p128 = por %p126, %p127
      %p129 = scmp.ne.s32.totalorder %s115, %s116
      %p130 = scmp.eq.s32.totalorder %s15, 1
      %p131 = por %p129, %p130
      %p133 = scmp.ne.s32.totalorder %s116, %s132
      %p134 = scmp.eq.s32.totalorder %s15, 0
      %p135 = por %p133, %p134
      %p136 = scmp.le.s32.totalorder 1, %s9
      %p137 = scmp.lt.s32.totalorder %s9, 3
      %p138 = pnand %p136, %p137
      %p139 = pneg %p138
      // Predicated region
      $region9: #{conv2d_pallas.1} parent=5 // pred_check
        _
      $region10: #{conv2d_pallas.1} parent=5 // pred_check_branch
        %141 = sbr.rel (%p138) target = $region12
      $region11: #{conv2d_pallas.1} parent=5 // pred_region
        %s142 = ssub.s32 %s9, 1
        // Predicated region
        $region13: #{conv2d_pallas.1} parent=11 // pred_check
          %p143 = pneg %p42
        $region14: #{conv2d_pallas.1} parent=11 // pred_check_branch
          %145 = sbr.rel (%p143) target = $region16
        $region15: #{conv2d_pallas.1} parent=11 // pred_region
          _
        $region16: #{conv2d_pallas.1} parent=11 // pred_fallthru
          _
      $region12: #{conv2d_pallas.1} parent=5 // pred_fallthru
        _
      %p146 = scmp.lt.s32.totalorder %s9, 2
      // Predicated region
      $region17: #{conv2d_pallas.1} parent=5 // pred_check
        %p147 = pneg %p146
      $region18: #{conv2d_pallas.1} parent=5 // pred_check_branch
        %149 = sbr.rel (%p147) target = $region20
      $region19: #{conv2d_pallas.1} parent=5 // pred_region
        // Predicated region
        $region21: #{conv2d_pallas.1} parent=19 // pred_check
          %p150 = pneg %p64
        $region22: #{conv2d_pallas.1} parent=19 // pred_check_branch
          %152 = sbr.rel (%p150) target = $region24
        $region23: #{conv2d_pallas.1} parent=19 // pred_region
          %s153 = sand.u32 %s54, 1
          %s154 = sand.u32 %s54, 1
          %s155 = smul.addr %s154, 16
          %s156 = scalar_lea.vmem [#allocation3], %s155
          %s157 = smul.addr %s16, 4
          %s158 = sadd.s32 %s17, %s157
          %s159 = smul.addr %s158, 8
          %s160 = scalar_lea.vmem %s1, %s159
          // Predicated region
          $region25: #{conv2d_pallas.1} parent=23 // pred_check
            _
          $region26: #{conv2d_pallas.1} parent=23 // pred_check_branch
            %162 = sbr.rel (0) target = $region28
          $region27: #{conv2d_pallas.1} parent=23 // pred_region
            // Predicated region
            $region29: #{conv2d_pallas.1} parent=27 // pred_check
              _
            $region30: #{conv2d_pallas.1} parent=27 // pred_check_branch
              %164 = sbr.rel (0) target = $region32
            $region31: #{conv2d_pallas.1} parent=27 // pred_region
              // Predicated region
              $region44: #{conv2d_pallas.1} parent=31 // pred_check
                _
              $region45: #{conv2d_pallas.1} parent=31 // pred_check_branch
                %182 = sbr.rel (0) target = $region47
              $region46: #{conv2d_pallas.1} parent=31 // pred_region
                loop: start=0, step=1, limit=1
                $region48: #{conv2d_pallas.1} parent=46 // loop_pre_header
                  _
                $region49: #{conv2d_pallas.1} parent=46 // loop_header
                  %s184 = sphi 0, %s188
                  %p185 = scmp.ge.s32.totalorder %s184, 1
                  %s189 = sphi %s160, %s160
                  %s190 = sphi %s156, %s156
                $region50: #{conv2d_pallas.1} parent=46 // loop_header_branch
                  %187 = sbr.rel (%p185) target = $region54
                $region51: #{conv2d_pallas.1} parent=46 // loop_body
                  %v191 = vld [vmem:[%s189] sm:$0xff]
                  %192 = vst [vmem:[%s190] sm:$0xff] %v191
                  %v193 = vld [vmem:[%s189 + $0x10] sm:$0xff]
                  %194 = vst [vmem:[%s190 + $0x8] sm:$0xff] %v193
                $region52: #{conv2d_pallas.1} parent=46 // loop_footer
                  %s188 = sadd.s32 1, %s184
                $region53: #{conv2d_pallas.1} parent=46 // loop_footer_branch
                  %183 = sbr.rel target = $region49
                $region54: #{conv2d_pallas.1} parent=46 // loop_exit
                  _
              $region47: #{conv2d_pallas.1} parent=31 // pred_fallthru
                _
              // Predicated region
              $region55: #{conv2d_pallas.1} parent=31 // pred_check
                _
              $region56: #{conv2d_pallas.1} parent=31 // pred_check_branch
                %196 = sbr.rel target = $region58
              $region57: #{conv2d_pallas.1} parent=31 // pred_region
                _
              $region58: #{conv2d_pallas.1} parent=31 // pred_fallthru
                _
            $region32: #{conv2d_pallas.1} parent=27 // pred_fallthru
              _
            // Predicated region
            $region33: #{conv2d_pallas.1} parent=27 // pred_check
              _
            $region34: #{conv2d_pallas.1} parent=27 // pred_check_branch
              %166 = sbr.rel target = $region36
            $region35: #{conv2d_pallas.1} parent=27 // pred_region
              %s168 = ssub.s32 256, 1
              loop: start=0, step=1, limit=1
              $region37: #{conv2d_pallas.1} parent=35 // loop_pre_header
                _
              $region38: #{conv2d_pallas.1} parent=35 // loop_header
                %s170 = sphi 0, %s174
                %p171 = scmp.ge.s32.totalorder %s170, 1
                %s175 = sphi %s160, %s160
                %s176 = sphi %s156, %s156
              $region39: #{conv2d_pallas.1} parent=35 // loop_header_branch
                %173 = sbr.rel (%p171) target = $region43
              $region40: #{conv2d_pallas.1} parent=35 // loop_body
                %v177 = vld [vmem:[%s175] sm:%s168]
                %178 = vst [vmem:[%s176] sm:%s168] %v177
                %v179 = vld [vmem:[%s175 + $0x10] sm:%s168]
                %180 = vst [vmem:[%s176 + $0x8] sm:%s168] %v179
              $region41: #{conv2d_pallas.1} parent=35 // loop_footer
                %s174 = sadd.s32 1, %s170
              $region42: #{conv2d_pallas.1} parent=35 // loop_footer_branch
                %169 = sbr.rel target = $region38
              $region43: #{conv2d_pallas.1} parent=35 // loop_exit
                _
            $region36: #{conv2d_pallas.1} parent=27 // pred_fallthru
              _
          $region28: #{conv2d_pallas.1} parent=23 // pred_fallthru
            _
          %197 = vnop
        $region24: #{conv2d_pallas.1} parent=19 // pred_fallthru
          _
        // Predicated region
        $region59: #{conv2d_pallas.1} parent=19 // pred_check
          %p198 = pneg %p94
        $region60: #{conv2d_pallas.1} parent=19 // pred_check_branch
          %200 = sbr.rel (%p198) target = $region62
        $region61: #{conv2d_pallas.1} parent=19 // pred_region
          %s201 = sand.u32 %s84, 1
          %s202 = sand.u32 %s84, 1
          %s203 = smul.addr %s202, 16
          %s204 = scalar_lea.vmem [#allocation4], %s203
          %s205 = sadd.s32 %s17, 1
          %s206 = smul.addr %s16, 4
          %s207 = sadd.s32 %s205, %s206
          %s208 = smul.addr %s207, 8
          %s209 = scalar_lea.vmem %s2, %s208
          // Predicated region
          $region63: #{conv2d_pallas.1} parent=61 // pred_check
            _
          $region64: #{conv2d_pallas.1} parent=61 // pred_check_branch
            %211 = sbr.rel (0) target = $region66
          $region65: #{conv2d_pallas.1} parent=61 // pred_region
            // Predicated region
            $region67: #{conv2d_pallas.1} parent=65 // pred_check
              _
            $region68: #{conv2d_pallas.1} parent=65 // pred_check_branch
              %213 = sbr.rel (0) target = $region70
            $region69: #{conv2d_pallas.1} parent=65 // pred_region
              // Predicated region
              $region82: #{conv2d_pallas.1} parent=69 // pred_check
                _
              $region83: #{conv2d_pallas.1} parent=69 // pred_check_branch
                %231 = sbr.rel (0) target = $region85
              $region84: #{conv2d_pallas.1} parent=69 // pred_region
                loop: start=0, step=1, limit=1
                $region86: #{conv2d_pallas.1} parent=84 // loop_pre_header
                  _
                $region87: #{conv2d_pallas.1} parent=84 // loop_header
                  %s233 = sphi 0, %s237
                  %p234 = scmp.ge.s32.totalorder %s233, 1
                  %s238 = sphi %s209, %s209
                  %s239 = sphi %s204, %s204
                $region88: #{conv2d_pallas.1} parent=84 // loop_header_branch
                  %236 = sbr.rel (%p234) target = $region92
                $region89: #{conv2d_pallas.1} parent=84 // loop_body
                  %v240 = vld [vmem:[%s238] sm:$0xff]
                  %241 = vst [vmem:[%s239] sm:$0xff] %v240
                  %v242 = vld [vmem:[%s238 + $0x10] sm:$0xff]
                  %243 = vst [vmem:[%s239 + $0x8] sm:$0xff] %v242
                $region90: #{conv2d_pallas.1} parent=84 // loop_footer
                  %s237 = sadd.s32 1, %s233
                $region91: #{conv2d_pallas.1} parent=84 // loop_footer_branch
                  %232 = sbr.rel target = $region87
                $region92: #{conv2d_pallas.1} parent=84 // loop_exit
                  _
              $region85: #{conv2d_pallas.1} parent=69 // pred_fallthru
                _
              // Predicated region
              $region93: #{conv2d_pallas.1} parent=69 // pred_check
                _
              $region94: #{conv2d_pallas.1} parent=69 // pred_check_branch
                %245 = sbr.rel target = $region96
              $region95: #{conv2d_pallas.1} parent=69 // pred_region
                _
              $region96: #{conv2d_pallas.1} parent=69 // pred_fallthru
                _
            $region70: #{conv2d_pallas.1} parent=65 // pred_fallthru
              _
            // Predicated region
            $region71: #{conv2d_pallas.1} parent=65 // pred_check
              _
            $region72: #{conv2d_pallas.1} parent=65 // pred_check_branch
              %215 = sbr.rel target = $region74
            $region73: #{conv2d_pallas.1} parent=65 // pred_region
              %s217 = ssub.s32 256, 1
              loop: start=0, step=1, limit=1
              $region75: #{conv2d_pallas.1} parent=73 // loop_pre_header
                _
              $region76: #{conv2d_pallas.1} parent=73 // loop_header
                %s219 = sphi 0, %s223
                %p220 = scmp.ge.s32.totalorder %s219, 1
                %s224 = sphi %s209, %s209
                %s225 = sphi %s204, %s204
              $region77: #{conv2d_pallas.1} parent=73 // loop_header_branch
                %222 = sbr.rel (%p220) target = $region81
              $region78: #{conv2d_pallas.1} parent=73 // loop_body
                %v226 = vld [vmem:[%s224] sm:%s217]
                %227 = vst [vmem:[%s225] sm:%s217] %v226
                %v228 = vld [vmem:[%s224 + $0x10] sm:%s217]
                %229 = vst [vmem:[%s225 + $0x8] sm:%s217] %v228
              $region79: #{conv2d_pallas.1} parent=73 // loop_footer
                %s223 = sadd.s32 1, %s219
              $region80: #{conv2d_pallas.1} parent=73 // loop_footer_branch
                %218 = sbr.rel target = $region76
              $region81: #{conv2d_pallas.1} parent=73 // loop_exit
                _
            $region74: #{conv2d_pallas.1} parent=65 // pred_fallthru
              _
          $region66: #{conv2d_pallas.1} parent=61 // pred_fallthru
            _
          %246 = vnop
        $region62: #{conv2d_pallas.1} parent=19 // pred_fallthru
          _
      $region20: #{conv2d_pallas.1} parent=5 // pred_fallthru
        _
      %p247 = scmp.le.s32.totalorder 1, %s9
      %p248 = scmp.lt.s32.totalorder %s9, 3
      %p249 = pnand %p247, %p248
      %p250 = pneg %p249
      // Predicated region
      $region97: #{conv2d_pallas.1} parent=5 // pred_check
        _
      $region98: #{conv2d_pallas.1} parent=5 // pred_check_branch
        %252 = sbr.rel (%p249) target = $region100
      $region99: #{conv2d_pallas.1} parent=5 // pred_region
        %s253 = ssub.s32 %s9, 1
        %s254 = sand.u32 %s57, 1
        %s255 = sand.u32 %s57, 1
        %s256 = smul.addr %s255, 16
        %s257 = scalar_lea.vmem [#allocation3], %s256
        // Predicated region
        $region101: #{conv2d_pallas.1} parent=99 // pred_check
          %p258 = pneg %p70
        $region102: #{conv2d_pallas.1} parent=99 // pred_check_branch
          %260 = sbr.rel (%p258) target = $region104
        $region103: #{conv2d_pallas.1} parent=99 // pred_region
          _
        $region104: #{conv2d_pallas.1} parent=99 // pred_fallthru
          _
        %s261 = sand.u32 %s87, 1
        %s262 = sand.u32 %s87, 1
        %s263 = smul.addr %s262, 16
        %s264 = scalar_lea.vmem [#allocation4], %s263
        // Predicated region
        $region105: #{conv2d_pallas.1} parent=99 // pred_check
          %p265 = pneg %p100
        $region106: #{conv2d_pallas.1} parent=99 // pred_check_branch
          %267 = sbr.rel (%p265) target = $region108
        $region107: #{conv2d_pallas.1} parent=99 // pred_region
          _
        $region108: #{conv2d_pallas.1} parent=99 // pred_fallthru
          _
        %p268 = pneg %p42
        %p269 = pneg %p39
        %s270 = sand.u32 %s57, 1
        %s271 = sand.u32 %s57, 1
        %s272 = smul.addr %s271, 16
        %s273 = scalar_lea.vmem [#allocation3], %s272
        %p274 = pneg %p70
        %p275 = pneg %p67
        %s276 = sand.u32 %s87, 1
        %s277 = sand.u32 %s87, 1
        %s278 = smul.addr %s277, 16
        %s279 = scalar_lea.vmem [#allocation4], %s278
        %p280 = pneg %p100
        %p281 = pneg %p97
        %p282 = pneg %p128
        %p283 = pneg %p125
        %p284 = scmp.lt.s32.totalorder %s18, 1
        %s285 = scalar_select %p284, %s18, 1
        %p286 = scmp.lt.s32.totalorder %s19, 0
        %s287 = scalar_select %p286, %s19, 0
        %s288 = sadd.s32 %s287, %s285
        %s289 = smul.addr %s288, 8
        %s290 = scalar_lea.vmem %s3, %s289
        %s291 = sadd.s32 %s19, 1
        %p292 = scmp.lt.s32.totalorder %s18, 1
        %s293 = scalar_select %p292, %s18, 1
        %p294 = scmp.lt.s32.totalorder %s19, 0
        %s295 = scalar_select %p294, %s19, 0
        %s296 = sadd.s32 %s295, %s293
        %s297 = smul.addr %s296, 8
        %s298 = scalar_lea.vmem %s3, %s297
        %v299 = vld [vmem:[%s257] sm:$0xff]
        %v300 = vld [vmem:[%s257 + $0x8] sm:$0xff]
        %v301 = vld [vmem:[%s264] sm:$0xff]
        %v302 = vld [vmem:[%s264 + $0x8] sm:$0xff]
        %303 = vst [vmem:[#allocation2] sm:$0xff] %v299
        %304 = vst [vmem:[#allocation2 + $0x8] sm:$0xff] %v300
        %309 = vrot.lane.b32.xlu0 %v299, 127
        %v310 = vpop.permute.xlu0 %309
        %311 = vrot.lane.b32.xlu0 %v301, 127
        %v312 = vpop.permute.xlu0 %311
        %313 = vrot.lane.b32.xlu0 %v300, 127
        %v314 = vpop.permute.xlu0 %313
        %315 = vrot.lane.b32.xlu0 %v302, 127
        %v316 = vpop.permute.xlu0 %315
        %vm317 = vcmask 1039360
        %v318 = vsel %vm317, %v310, %v312
        %v319 = vsel %vm317, %v314, %v316
        %322 = vst [vmem:[#allocation2 + $0x10] sm:$0xff] %v318
        %323 = vst [vmem:[#allocation2 + $0x18] sm:$0xff] %v319
        %324 = vrot.lane.b32.xlu0 %v299, 119
        %v325 = vpop.permute.xlu0 %324
        %326 = vrot.lane.b32.xlu0 %v301, 119
        %v327 = vpop.permute.xlu0 %326
        %328 = vrot.lane.b32.xlu0 %v300, 119
        %v329 = vpop.permute.xlu0 %328
        %330 = vrot.lane.b32.xlu0 %v302, 119
        %v331 = vpop.permute.xlu0 %330
        %vm332 = vcmask 973824
        %v333 = vsel %vm332, %v325, %v327
        %v334 = vsel %vm332, %v329, %v331
        %337 = vst [vmem:[#allocation2 + $0x20] sm:$0xff] %v333
        %338 = vst [vmem:[#allocation2 + $0x28] sm:$0xff] %v334
        %339 = vrot.lane.b32.xlu0 %v299, 118
        %v340 = vpop.permute.xlu0 %339
        %341 = vrot.lane.b32.xlu0 %v301, 118
        %v342 = vpop.permute.xlu0 %341
        %343 = vrot.lane.b32.xlu0 %v300, 118
        %v344 = vpop.permute.xlu0 %343
        %345 = vrot.lane.b32.xlu0 %v302, 118
        %v346 = vpop.permute.xlu0 %345
        %vm347 = vcmask 965632
        %v348 = vsel %vm347, %v340, %v342
        %v349 = vsel %vm347, %v344, %v346
        %352 = vst [vmem:[#allocation2 + $0x30] sm:$0xff] %v348
        %353 = vst [vmem:[#allocation2 + $0x38] sm:$0xff] %v349
        %v354 = vld [vmem:[%s0] sm:$0xff]
        %v355 = vld [vmem:[#allocation2] sm:$0xff]
        %v356 = vld [vmem:[#allocation2 + $0x8] sm:$0xff]
        %v357 = vld [vmem:[#allocation2 + $0x10] sm:$0xff]
        %v358 = vld [vmem:[#allocation2 + $0x18] sm:$0xff]
        %v359 = vld [vmem:[#allocation2 + $0x20] sm:$0xff]
        %v360 = vld [vmem:[#allocation2 + $0x28] sm:$0xff]
        %v361 = vld [vmem:[#allocation2 + $0x30] sm:$0xff]
        %v362 = vld [vmem:[#allocation2 + $0x38] sm:$0xff]
        %vm363 = vcmask 523264
        %v365 = vsel %vm363, %v354, 0
        %367 = vmatpush.msra.mxu0 0.0
        %368 = vmatpush.msra.mxu0 0.0
        %369 = vmatpush.msra.mxu0 0.0
        %370 = vmatpush.msra.mxu0 0.0
        %371 = vmatpush.msra.mxu0 0.0
        %372 = vmatpush.msra.mxu0 0.0
        %373 = vmatpush.msra.mxu0 0.0
        %374 = vmatpush.msra.mxu0 0.0
        %375 = vmatpush.msra.mxu0 %v362
        %376 = vmatpush.msra.mxu0 %v361
        %377 = vmatpush.msra.mxu0 %v360
        %378 = vmatpush.msra.mxu0 %v359
        %379 = vmatpush.msra.mxu0 %v358
        %380 = vmatpush.msra.mxu0 %v357
        %381 = vmatpush.msra.mxu0 %v356
        %382 = vmatpush.msra.mxu0 %v355
        %383 = vmatmul.f32.gmra.mxu0 %v365
        %v384 = vpop.f32.mrf.mxu0
        %v385 = vadd.f32 0.0, %v384
        %386 = vdwg.mxu0
        %387 = vst [vmem:[%s298] sm:$0xff] %v385
        %p388 = scmp.lt.s32.totalorder %s18, 1
        %s389 = scalar_select %p388, %s18, 1
        %p390 = scmp.lt.s32.totalorder %s19, 0
        %s391 = scalar_select %p390, %s19, 0
        %s392 = sadd.s32 %s391, %s389
        %s393 = smul.addr %s392, 8
        %s394 = scalar_lea.vmem %s3, %s393
        // Predicated region
        $region109: #{conv2d_pallas.1} parent=99 // pred_check
          %p395 = pneg %p125
        $region110: #{conv2d_pallas.1} parent=99 // pred_check_branch
          %397 = sbr.rel (%p395) target = $region112
        $region111: #{conv2d_pallas.1} parent=99 // pred_region
          _
        $region112: #{conv2d_pallas.1} parent=99 // pred_fallthru
          _
      $region100: #{conv2d_pallas.1} parent=5 // pred_fallthru
        _
      %p398 = scmp.le.s32.totalorder 2, %s9
      // Predicated region
      $region113: #{conv2d_pallas.1} parent=5 // pred_check
        %p399 = pneg %p398
      $region114: #{conv2d_pallas.1} parent=5 // pred_check_branch
        %401 = sbr.rel (%p399) target = $region116
      $region115: #{conv2d_pallas.1} parent=5 // pred_region
        %s402 = ssub.s32 %s9, 2
        // Predicated region
        $region117: #{conv2d_pallas.1} parent=115 // pred_check
          %p403 = pneg %p131
        $region118: #{conv2d_pallas.1} parent=115 // pred_check_branch
          %405 = sbr.rel (%p403) target = $region120
        $region119: #{conv2d_pallas.1} parent=115 // pred_region
          %p406 = scmp.lt.s32.totalorder %s20, 1
          %s407 = scalar_select %p406, %s20, 1
          %p408 = scmp.lt.s32.totalorder %s21, 0
          %s409 = scalar_select %p408, %s21, 0
          %s410 = sadd.s32 %s409, %s407
          %s411 = smul.addr %s410, 8
          %s412 = scalar_lea.vmem %s3, %s411
        $region120: #{conv2d_pallas.1} parent=115 // pred_fallthru
          _
      $region116: #{conv2d_pallas.1} parent=5 // pred_fallthru
        _
    $region6: #{conv2d_pallas.1} parent=1 // loop_footer
      %s13 = sadd.s32 1, %s9
    $region7: #{conv2d_pallas.1} parent=1 // loop_footer_branch
      %8 = sbr.rel target = $region3
    $region8: #{conv2d_pallas.1} parent=1 // loop_exit
      _

</llo_original>
